<compile_context>
chip_gen: v6e
topology: v6e:2x2x1
jax: 0.10.0
libtpu: 0.0.40
codegen_flags: <defaults>
</compile_context>

<pallas_src>
import functools

import jax
import jax.numpy as jnp
from jax.experimental import pallas as pl
from jax.experimental.pallas import tpu as pltpu

LEAKY_SLOPE = 0.01   # torch.nn.LeakyReLU default
BN_EPS = 1e-5        # torch.nn.BatchNorm1d default


# ---------------------------------------------------------------------------
# In-kernel helpers (operate on (N, C) values, N = B * L rows of time steps).
# ---------------------------------------------------------------------------
def _shift_rows_up(v):
    # result[t] = v[t-1]  (wraps at the very first row; caller fixes boundaries)
    return jnp.concatenate([v[-1:, :], v[:-1, :]], axis=0)


def _shift_rows_down(v):
    # result[t] = v[t+1]  (wraps at the very last row; caller fixes boundaries)
    return jnp.concatenate([v[1:, :], v[:1, :]], axis=0)


def _select_rows(mask_col, a, b):
    # mask_col: (N, 1) f32 in {0, 1}.  Returns a where mask==1 else b.
    # Broadcast the f32 mask along lanes explicitly (cheap, layout-friendly).
    m = jnp.broadcast_to(mask_col, a.shape)
    return jnp.where(m > 0.5, a, b)


def _im2col_reflect_k3(v, is_first, is_last):
    """(N, C) -> (N, 3C) = [v[t-1] | v[t] | v[t+1]] with reflect padding.

    Rows are B stacked segments of length L; `is_first` / `is_last` mark the
    first / last row of each segment, where the reflected neighbour is the
    *other* wrap-shifted array's value (reflect pad=1 => x[1] / x[L-2]).
    """
    prev_r = _shift_rows_up(v)
    next_r = _shift_rows_down(v)
    prev = _select_rows(is_first, next_r, prev_r)   # reflect: v[1]
    nxt = _select_rows(is_last, prev_r, next_r)     # reflect: v[L-2]
    return jnp.concatenate([prev, v, nxt], axis=-1)


# ---------------------------------------------------------------------------
# Fused kernel: conv1 -> BN(train) -> LeakyReLU -> conv2 (dense) [-> +x]
# ---------------------------------------------------------------------------
def enc_conv_block_kernel(x_ref, isf_ref, isl_ref, w1_ref, b1_ref, g_ref,
                          beta_ref, w2_ref, b2_ref, out_ref, *, add_residual):
    x = x_ref[...].astype(jnp.float32)          # (N, c_in), N = B*L
    isf = isf_ref[...]                          # (N, 1)
    isl = isl_ref[...]                          # (N, 1)

    # --- Conv1 as a single lane-contiguous im2col matmul (K = 3*c_in) ---
    # NOTE: on v6e/v7x, casting the matmul operands to bf16 (keeping f32
    # accumulation) doubles MXU throughput at large channel counts; kept f32
    # here to match PyTorch f32 numerics exactly.
    xcat = _im2col_reflect_k3(x, isf, isl)                       # (N, 3*c_in)
    h = jnp.dot(xcat, w1_ref[...], preferred_element_type=jnp.float32)
    h = h + b1_ref[...]                                          # (N, c_h)

    # --- BatchNorm1d, training mode (biased batch variance), folded into a
    #     single per-channel scale/shift applied as one FMA. ---
    mean = jnp.mean(h, axis=0, keepdims=True)                    # (1, c_h)
    var = jnp.mean(jnp.square(h - mean), axis=0, keepdims=True)  # (1, c_h)
    scale = g_ref[...] * jax.lax.rsqrt(var + BN_EPS)
    shift = beta_ref[...] - mean * scale
    h = h * scale + shift

    # --- LeakyReLU ---
    h = jnp.where(h > 0, h, LEAKY_SLOPE * h)

    # --- Conv2 (dense; stride>1 is a wrapper-side subsample of this output) ---
    hcat = _im2col_reflect_k3(h, isf, isl)                       # (N, 3*c_h)
    y = jnp.dot(hcat, w2_ref[...], preferred_element_type=jnp.float32)
    y = y + b2_ref[...]                                          # (N, c_in)

    if add_residual:                 # subsample == 1: residual fused in-kernel
        y = y + x
    out_ref[...] = y.astype(out_ref.dtype)


# ---------------------------------------------------------------------------
# Wrapper: layout plumbing + pallas_call + (subsample>1) residual glue.
# ---------------------------------------------------------------------------
def enc_conv_block(x, params, subsample=1):
    w1, b1, gamma, beta, w2, b2 = params
    B, c_in, L = x.shape
    c_h = w1.shape[0]
    assert L % subsample == 0 and L >= 2

    # One-time layout plumbing: NCL -> (B*L, C), channels on the lane axis,
    # and (Cout, Cin, 3) weights -> (3*Cin, Cout) im2col matrices.
    x2d = jnp.transpose(x, (0, 2, 1)).reshape(B * L, c_in).astype(jnp.float32)
    w1c = jnp.transpose(w1, (2, 1, 0)).reshape(3 * c_in, c_h)
    w2c = jnp.transpose(w2, (2, 1, 0)).reshape(3 * c_h, c_in)
    b1r = b1.reshape(1, c_h)
    b2r = b2.reshape(1, c_in)
    gr = gamma.reshape(1, c_h)
    br = beta.reshape(1, c_h)

    # Segment-boundary masks for reflect padding (index plumbing, computed once).
    pos = jnp.arange(B * L, dtype=jnp.int32) % L
    isf = (pos == 0).astype(jnp.float32).reshape(B * L, 1)
    isl = (pos == L - 1).astype(jnp.float32).reshape(B * L, 1)

    # Tiny problem -> single gridless, fully VMEM-resident call.
    # TODO(synk): at realistic (B, L), tile L with a halo of 2, compute BN batch
    # stats in a first pass, and mark the L axis "parallel" for v7x's 2 cores.
    vmem = pl.BlockSpec(memory_space=pltpu.MemorySpace.VMEM)
    kernel = functools.partial(enc_conv_block_kernel,
                               add_residual=(subsample == 1))
    y2d = pl.pallas_call(
        kernel,
        out_shape=jax.ShapeDtypeStruct((B * L, c_in), jnp.float32),
        in_specs=[vmem] * 9,
        out_specs=vmem,
    )(x2d, isf, isl, w1c, b1r, gr, br, w2c, b2r)

    y = jnp.transpose(y2d.reshape(B, L, c_in), (0, 2, 1))   # back to NCL
    if subsample == 1:
        return y                                            # residual fused
    # subsample > 1: strided conv2 == dense conv2 sampled every `subsample`
    # steps; residual branch is avg_pool1d(x, subsample).  (plain-JAX glue)
    y = y[:, :, ::subsample]
    xr = jnp.mean(x.reshape(B, c_in, L // subsample, subsample), axis=-1)
    return xr + y


# ---------------------------------------------------------------------------
# Deterministic synthetic parameters (PyTorch-shaped) and pure-JAX reference.
# ---------------------------------------------------------------------------
def init_params(key, c_in, c_h):
    k1, k2, k3, k4 = jax.random.split(key, 4)
    ks = 3

    def xavier_uniform(k, c_out, c_inn):
        fan_in, fan_out = c_inn * ks, c_out * ks
        bound = jnp.sqrt(6.0 / (fan_in + fan_out))     # gain('linear') == 1
        return jax.random.uniform(k, (c_out, c_inn, ks), jnp.float32,
                                  -bound, bound)

    def conv_bias(k, c_out, c_inn):
        bound = 1.0 / jnp.sqrt(c_inn * ks)
        return jax.random.uniform(k, (c_out,), jnp.float32, -bound, bound)

    w1 = xavier_uniform(k1, c_h, c_in)
    b1 = conv_bias(k2, c_h, c_in)
    gamma = jnp.ones((c_h,), jnp.float32)              # BatchNorm weight init
    beta = jnp.zeros((c_h,), jnp.float32)              # BatchNorm bias init
    w2 = xavier_uniform(k3, c_in, c_h)
    b2 = conv_bias(k4, c_in, c_h)
    return (w1, b1, gamma, beta, w2, b2)


def _reflect_pad1(x):
    return jnp.concatenate([x[:, :, 1:2], x, x[:, :, -2:-1]], axis=-1)


def _conv1d_k3_ref(x, w, b, stride=1):
    L = x.shape[-1]
    xp = _reflect_pad1(x)
    y = sum(jnp.einsum("oi,bil->bol", w[:, :, k], xp[:, :, k:k + L],
                       precision=jax.lax.Precision.HIGHEST)
            for k in range(3))
    y = y + b[None, :, None]
    if stride > 1:
        y = y[:, :, ::stride]
    return y


def reference_forward(x, params, subsample=1):
    """Pure-JAX mirror of EncConvBlock.forward (f32, training-mode BN)."""
    w1, b1, gamma, beta, w2, b2 = params
    h = _conv1d_k3_ref(x, w1, b1)
    mean = jnp.mean(h, axis=(0, 2), keepdims=True)
    var = jnp.mean((h - mean) ** 2, axis=(0, 2), keepdims=True)
    h = (h - mean) * jax.lax.rsqrt(var + BN_EPS)
    h = h * gamma[None, :, None] + beta[None, :, None]
    h = jnp.where(h > 0, h, LEAKY_SLOPE * h)
    y = _conv1d_k3_ref(h, w2, b2, stride=subsample)
    xr = x
    if subsample > 1:
        B, C, L = x.shape
        xr = jnp.mean(x.reshape(B, C, L // subsample, subsample), axis=-1)
    return xr + y


if __name__ == "__main__":
    B, C_IN, C_H, L = 2, 4, 8, 16

    key = jax.random.PRNGKey(0)
    kx, kp = jax.random.split(key)
    x = jax.random.normal(kx, (B, C_IN, L), jnp.float32)
    params = init_params(kp, C_IN, C_H)

    # Tolerance covers the MXU's default f32 matmul precision vs. the
    # Precision.HIGHEST XLA reference; any semantic bug produces O(0.1+) errors.
    TOL = 1e-2

    # subsample = 1 (module default): whole block fused in one kernel call.
    out1 = jax.block_until_ready(enc_conv_block(x, params, subsample=1))
    ref1 = reference_forward(x, params, subsample=1)
    assert out1.shape == (B, C_IN, L), out1.shape
    assert jnp.allclose(out1, ref1, atol=TOL, rtol=TOL), \
        float(jnp.max(jnp.abs(out1 - ref1)))

    # subsample = 2: strided second conv + avg-pooled residual (wrapper glue).
    out2 = jax.block_until_ready(enc_conv_block(x, params, subsample=2))
    ref2 = reference_forward(x, params, subsample=2)
    assert out2.shape == (B, C_IN, L // 2), out2.shape
    assert jnp.allclose(out2, ref2, atol=TOL, rtol=TOL), \
        float(jnp.max(jnp.abs(out2 - ref2)))

    print("KERNEL_OK")
</pallas_src>

<mosaic_0001>
module attributes {stable_mosaic.version = 11 : i64} {
  func.func @enc_conv_block_kernel(%arg0: memref<32x4xf32, #tpu.memory_space<vmem>>, %arg1: memref<32x1xf32, #tpu.memory_space<vmem>>, %arg2: memref<32x1xf32, #tpu.memory_space<vmem>>, %arg3: memref<12x8xf32, #tpu.memory_space<vmem>>, %arg4: memref<1x8xf32, #tpu.memory_space<vmem>>, %arg5: memref<1x8xf32, #tpu.memory_space<vmem>>, %arg6: memref<1x8xf32, #tpu.memory_space<vmem>>, %arg7: memref<24x4xf32, #tpu.memory_space<vmem>>, %arg8: memref<1x4xf32, #tpu.memory_space<vmem>>, %arg9: memref<32x4xf32, #tpu.memory_space<vmem>>) attributes {dimension_semantics = [], scalar_prefetch = 0 : i64, scratch_operands = 0 : i64, tpu.core_type = #tpu.core_type<tc>} {
    %c0 = arith.constant 0 : index
    %c0_0 = arith.constant 0 : index
    %0 = vector.load %arg0[%c0, %c0_0] : memref<32x4xf32, #tpu.memory_space<vmem>>, vector<32x4xf32>
    %c0_1 = arith.constant 0 : index
    %c0_2 = arith.constant 0 : index
    %1 = vector.load %arg1[%c0_1, %c0_2] : memref<32x1xf32, #tpu.memory_space<vmem>>, vector<32x1xf32>
    %c0_3 = arith.constant 0 : index
    %c0_4 = arith.constant 0 : index
    %2 = vector.load %arg2[%c0_3, %c0_4] : memref<32x1xf32, #tpu.memory_space<vmem>>, vector<32x1xf32>
    %3 = vector.extract_strided_slice %0 {offsets = [31, 0], sizes = [1, 4], strides = [1, 1]} : vector<32x4xf32> to vector<1x4xf32>
    %4 = vector.extract_strided_slice %0 {offsets = [0, 0], sizes = [31, 4], strides = [1, 1]} : vector<32x4xf32> to vector<31x4xf32>
    %5 = tpu.concatenate %3, %4 in 0 : vector<1x4xf32>, vector<31x4xf32> -> vector<32x4xf32>
    %6 = vector.extract_strided_slice %0 {offsets = [1, 0], sizes = [31, 4], strides = [1, 1]} : vector<32x4xf32> to vector<31x4xf32>
    %7 = vector.extract_strided_slice %0 {offsets = [0, 0], sizes = [1, 4], strides = [1, 1]} : vector<32x4xf32> to vector<1x4xf32>
    %8 = tpu.concatenate %6, %7 in 0 : vector<31x4xf32>, vector<1x4xf32> -> vector<32x4xf32>
    %9 = vector.shape_cast %1 : vector<32x1xf32> to vector<32x1xf32>
    %10 = vector.broadcast %9 : vector<32x1xf32> to vector<32x4xf32>
    %cst = arith.constant 5.000000e-01 : f32
    %11 = vector.broadcast %cst : f32 to vector<32x4xf32>
    %12 = arith.cmpf ogt, %10, %11 : vector<32x4xf32>
    %13 = arith.select %12, %8, %5 : vector<32x4xi1>, vector<32x4xf32>
    %14 = vector.shape_cast %2 : vector<32x1xf32> to vector<32x1xf32>
    %15 = vector.broadcast %14 : vector<32x1xf32> to vector<32x4xf32>
    %cst_5 = arith.constant 5.000000e-01 : f32
    %16 = vector.broadcast %cst_5 : f32 to vector<32x4xf32>
    %17 = arith.cmpf ogt, %15, %16 : vector<32x4xf32>
    %18 = arith.select %17, %5, %8 : vector<32x4xi1>, vector<32x4xf32>
    %19 = tpu.concatenate %13, %0, %18 in 1 : vector<32x4xf32>, vector<32x4xf32>, vector<32x4xf32> -> vector<32x12xf32>
    %c0_6 = arith.constant 0 : index
    %c0_7 = arith.constant 0 : index
    %20 = vector.load %arg3[%c0_6, %c0_7] : memref<12x8xf32, #tpu.memory_space<vmem>>, vector<12x8xf32>
    %cst_8 = arith.constant dense<0.000000e+00> : vector<32x8xf32>
    %21 = tpu.matmul %19, %20, %cst_8 {dimension_numbers = #tpu.dot_dimension_numbers<[1], [0], [0], [1], [0, 0, 1, 1], [], []>} : vector<32x12xf32>, vector<12x8xf32>, vector<32x8xf32> -> vector<32x8xf32>
    %c0_9 = arith.constant 0 : index
    %c0_10 = arith.constant 0 : index
    %22 = vector.load %arg4[%c0_9, %c0_10] : memref<1x8xf32, #tpu.memory_space<vmem>>, vector<1x8xf32>
    %23 = vector.broadcast %22 : vector<1x8xf32> to vector<32x8xf32>
    %24 = arith.addf %21, %23 : vector<32x8xf32>
    %cst_11 = arith.constant dense<0.000000e+00> : vector<8xf32>
    %25 = vector.multi_reduction <add>, %24, %cst_11 [0] : vector<32x8xf32> to vector<8xf32>
    %26 = vector.shape_cast %25 : vector<8xf32> to vector<1x8xf32>
    %cst_12 = arith.constant 3.200000e+01 : f32
    %27 = vector.broadcast %cst_12 : f32 to vector<1x8xf32>
    %28 = arith.divf %26, %27 : vector<1x8xf32>
    %29 = vector.broadcast %28 : vector<1x8xf32> to vector<32x8xf32>
    %30 = arith.subf %24, %29 : vector<32x8xf32>
    %31 = arith.mulf %30, %30 : vector<32x8xf32>
    %cst_13 = arith.constant dense<0.000000e+00> : vector<8xf32>
    %32 = vector.multi_reduction <add>, %31, %cst_13 [0] : vector<32x8xf32> to vector<8xf32>
    %33 = vector.shape_cast %32 : vector<8xf32> to vector<1x8xf32>
    %cst_14 = arith.constant 3.200000e+01 : f32
    %34 = vector.broadcast %cst_14 : f32 to vector<1x8xf32>
    %35 = arith.divf %33, %34 : vector<1x8xf32>
    %c0_15 = arith.constant 0 : index
    %c0_16 = arith.constant 0 : index
    %36 = vector.load %arg5[%c0_15, %c0_16] : memref<1x8xf32, #tpu.memory_space<vmem>>, vector<1x8xf32>
    %cst_17 = arith.constant 9.99999974E-6 : f32
    %37 = vector.broadcast %cst_17 : f32 to vector<1x8xf32>
    %38 = arith.addf %35, %37 : vector<1x8xf32>
    %39 = math.rsqrt %38 : vector<1x8xf32>
    %40 = arith.mulf %36, %39 : vector<1x8xf32>
    %c0_18 = arith.constant 0 : index
    %c0_19 = arith.constant 0 : index
    %41 = vector.load %arg6[%c0_18, %c0_19] : memref<1x8xf32, #tpu.memory_space<vmem>>, vector<1x8xf32>
    %42 = arith.mulf %28, %40 : vector<1x8xf32>
    %43 = arith.subf %41, %42 : vector<1x8xf32>
    %44 = vector.broadcast %40 : vector<1x8xf32> to vector<32x8xf32>
    %45 = arith.mulf %24, %44 : vector<32x8xf32>
    %46 = vector.broadcast %43 : vector<1x8xf32> to vector<32x8xf32>
    %47 = arith.addf %45, %46 : vector<32x8xf32>
    %cst_20 = arith.constant 0.000000e+00 : f32
    %48 = vector.broadcast %cst_20 : f32 to vector<32x8xf32>
    %49 = arith.cmpf ogt, %47, %48 : vector<32x8xf32>
    %cst_21 = arith.constant 0.00999999977 : f32
    %50 = vector.broadcast %cst_21 : f32 to vector<32x8xf32>
    %51 = arith.mulf %50, %47 : vector<32x8xf32>
    %52 = arith.select %49, %47, %51 : vector<32x8xi1>, vector<32x8xf32>
    %53 = vector.extract_strided_slice %52 {offsets = [31, 0], sizes = [1, 8], strides = [1, 1]} : vector<32x8xf32> to vector<1x8xf32>
    %54 = vector.extract_strided_slice %52 {offsets = [0, 0], sizes = [31, 8], strides = [1, 1]} : vector<32x8xf32> to vector<31x8xf32>
    %55 = tpu.concatenate %53, %54 in 0 : vector<1x8xf32>, vector<31x8xf32> -> vector<32x8xf32>
    %56 = vector.extract_strided_slice %52 {offsets = [1, 0], sizes = [31, 8], strides = [1, 1]} : vector<32x8xf32> to vector<31x8xf32>
    %57 = vector.extract_strided_slice %52 {offsets = [0, 0], sizes = [1, 8], strides = [1, 1]} : vector<32x8xf32> to vector<1x8xf32>
    %58 = tpu.concatenate %56, %57 in 0 : vector<31x8xf32>, vector<1x8xf32> -> vector<32x8xf32>
    %59 = vector.shape_cast %1 : vector<32x1xf32> to vector<32x1xf32>
    %60 = vector.broadcast %59 : vector<32x1xf32> to vector<32x8xf32>
    %cst_22 = arith.constant 5.000000e-01 : f32
    %61 = vector.broadcast %cst_22 : f32 to vector<32x8xf32>
    %62 = arith.cmpf ogt, %60, %61 : vector<32x8xf32>
    %63 = arith.select %62, %58, %55 : vector<32x8xi1>, vector<32x8xf32>
    %64 = vector.shape_cast %2 : vector<32x1xf32> to vector<32x1xf32>
    %65 = vector.broadcast %64 : vector<32x1xf32> to vector<32x8xf32>
    %cst_23 = arith.constant 5.000000e-01 : f32
    %66 = vector.broadcast %cst_23 : f32 to vector<32x8xf32>
    %67 = arith.cmpf ogt, %65, %66 : vector<32x8xf32>
    %68 = arith.select %67, %55, %58 : vector<32x8xi1>, vector<32x8xf32>
    %69 = tpu.concatenate %63, %52, %68 in 1 : vector<32x8xf32>, vector<32x8xf32>, vector<32x8xf32> -> vector<32x24xf32>
    %c0_24 = arith.constant 0 : index
    %c0_25 = arith.constant 0 : index
    %70 = vector.load %arg7[%c0_24, %c0_25] : memref<24x4xf32, #tpu.memory_space<vmem>>, vector<24x4xf32>
    %cst_26 = arith.constant dense<0.000000e+00> : vector<32x4xf32>
    %71 = tpu.matmul %69, %70, %cst_26 {dimension_numbers = #tpu.dot_dimension_numbers<[1], [0], [0], [1], [0, 0, 1, 1], [], []>} : vector<32x24xf32>, vector<24x4xf32>, vector<32x4xf32> -> vector<32x4xf32>
    %c0_27 = arith.constant 0 : index
    %c0_28 = arith.constant 0 : index
    %72 = vector.load %arg8[%c0_27, %c0_28] : memref<1x4xf32, #tpu.memory_space<vmem>>, vector<1x4xf32>
    %73 = vector.broadcast %72 : vector<1x4xf32> to vector<32x4xf32>
    %74 = arith.addf %71, %73 : vector<32x4xf32>
    %75 = arith.addf %74, %0 : vector<32x4xf32>
    %c0_29 = arith.constant 0 : index
    %c0_30 = arith.constant 0 : index
    %76 = vector.load %arg9[%c0_29, %c0_30] : memref<32x4xf32, #tpu.memory_space<vmem>>, vector<32x4xf32>
    tpu.vector_store %arg9[%c0_29, %c0_30], %75 {strides = array<i32>} : memref<32x4xf32, #tpu.memory_space<vmem>>, vector<32x4xf32>,
    return
  }
}

</mosaic_0001>

<llo_original>
// kernel: tpu_custom_call.1
$region0: #{tpu_custom_call.1}
  #allocation0 [shape = 'u32[]', space=smem, size = 0x4, offset = 0x4, fixed_abs, tag = 'smem constant byte address 0x4 - core index']
  #allocation1 [shape = 'u32[144,128]{1,0:T(1,128)}', space=vmem, size = 0x12000, scoped, tag = 'internal scratch']
  %s0 = inlined_call_operand.vmem [shape: f32[32,4], index: 0, kind: input, shape index: {}]
  %s1 = inlined_call_operand.vmem [shape: f32[32,1], index: 1, kind: input, shape index: {}]
  %s2 = inlined_call_operand.vmem [shape: f32[32,1], index: 2, kind: input, shape index: {}]
  %s3 = inlined_call_operand.vmem [shape: f32[12,8], index: 3, kind: input, shape index: {}]
  %s4 = inlined_call_operand.vmem [shape: f32[1,8], index: 4, kind: input, shape index: {}]
  %s5 = inlined_call_operand.vmem [shape: f32[1,8], index: 5, kind: input, shape index: {}]
  %s6 = inlined_call_operand.vmem [shape: f32[1,8], index: 6, kind: input, shape index: {}]
  %s7 = inlined_call_operand.vmem [shape: f32[24,4], index: 7, kind: input, shape index: {}]
  %s8 = inlined_call_operand.vmem [shape: f32[1,4], index: 8, kind: input, shape index: {}]
  %s9 = inlined_call_operand.vmem [shape: f32[32,4], index: 9, kind: output, shape index: {}]
  %s10 = sld [smem:[#allocation0]]
  $region46: #{tpu_custom_call.1} parent=0
    _
  %s12 = ssub.s32 1, %s10
  %s13 = scalar_select 0, %s12, %s10
  // Predicated region
  $region2: #{tpu_custom_call.1} parent=0 // pred_check
    _
  $region3: #{tpu_custom_call.1} parent=0 // pred_check_branch
    %15 = sbr.rel (0) target = $region5
  $region4: #{tpu_custom_call.1} parent=0 // pred_region
    _
  $region5: #{tpu_custom_call.1} parent=0 // pred_fallthru
    _
  // Predicated region
  $region6: #{tpu_custom_call.1} parent=0 // pred_check
    _
  $region7: #{tpu_custom_call.1} parent=0 // pred_check_branch
    %17 = sbr.rel (0) target = $region9
  $region8: #{tpu_custom_call.1} parent=0 // pred_region
    _
  $region9: #{tpu_custom_call.1} parent=0 // pred_fallthru
    _
  // Predicated region
  $region10: #{tpu_custom_call.1} parent=0 // pred_check
    _
  $region11: #{tpu_custom_call.1} parent=0 // pred_check_branch
    %19 = sbr.rel (0) target = $region13
  $region12: #{tpu_custom_call.1} parent=0 // pred_region
    _
  $region13: #{tpu_custom_call.1} parent=0 // pred_fallthru
    _
  // Predicated region
  $region14: #{tpu_custom_call.1} parent=0 // pred_check
    _
  $region15: #{tpu_custom_call.1} parent=0 // pred_check_branch
    %21 = sbr.rel (0) target = $region17
  $region16: #{tpu_custom_call.1} parent=0 // pred_region
    _
  $region17: #{tpu_custom_call.1} parent=0 // pred_fallthru
    _
  // Predicated region
  $region18: #{tpu_custom_call.1} parent=0 // pred_check
    _
  $region19: #{tpu_custom_call.1} parent=0 // pred_check_branch
    %23 = sbr.rel (0) target = $region21
  $region20: #{tpu_custom_call.1} parent=0 // pred_region
    _
  $region21: #{tpu_custom_call.1} parent=0 // pred_fallthru
    _
  // Predicated region
  $region22: #{tpu_custom_call.1} parent=0 // pred_check
    _
  $region23: #{tpu_custom_call.1} parent=0 // pred_check_branch
    %25 = sbr.rel (0) target = $region25
  $region24: #{tpu_custom_call.1} parent=0 // pred_region
    _
  $region25: #{tpu_custom_call.1} parent=0 // pred_fallthru
    _
  // Predicated region
  $region26: #{tpu_custom_call.1} parent=0 // pred_check
    _
  $region27: #{tpu_custom_call.1} parent=0 // pred_check_branch
    %27 = sbr.rel (0) target = $region29
  $region28: #{tpu_custom_call.1} parent=0 // pred_region
    _
  $region29: #{tpu_custom_call.1} parent=0 // pred_fallthru
    _
  // Predicated region
  $region30: #{tpu_custom_call.1} parent=0 // pred_check
    _
  $region31: #{tpu_custom_call.1} parent=0 // pred_check_branch
    %29 = sbr.rel (0) target = $region33
  $region32: #{tpu_custom_call.1} parent=0 // pred_region
    _
  $region33: #{tpu_custom_call.1} parent=0 // pred_fallthru
    _
  // Predicated region
  $region34: #{tpu_custom_call.1} parent=0 // pred_check
    _
  $region35: #{tpu_custom_call.1} parent=0 // pred_check_branch
    %31 = sbr.rel (0) target = $region37
  $region36: #{tpu_custom_call.1} parent=0 // pred_region
    _
  $region37: #{tpu_custom_call.1} parent=0 // pred_fallthru
    _
  %v32 = vld [vmem:[%s0] sm:$0xff]
  %v33 = vld [vmem:[%s0 + $0x8] sm:$0xff]
  %v34 = vld [vmem:[%s0 + $0x10] sm:$0xff]
  %v35 = vld [vmem:[%s0 + $0x18] sm:$0xff]
  %v36 = vld [vmem:[%s1] sm:$0xff]
  %v37 = vld [vmem:[%s1 + $0x8] sm:$0xff]
  %v38 = vld [vmem:[%s1 + $0x10] sm:$0xff]
  %v39 = vld [vmem:[%s1 + $0x18] sm:$0xff]
  %v40 = vld [vmem:[%s2] sm:$0xff]
  %v41 = vld [vmem:[%s2 + $0x8] sm:$0xff]
  %v42 = vld [vmem:[%s2 + $0x10] sm:$0xff]
  %v43 = vld [vmem:[%s2 + $0x18] sm:$0xff]
  %v45 = vrot.slane %v35, 7
  %vm50 = vcmask 1040384
  %v51 = vrot.slane %v32, 7
  %v52 = vrot.slane %v33, 7
  %v53 = vsel %vm50, %v51, %v52
  %v54 = vrot.slane %v34, 7
  %v55 = vsel %vm50, %v52, %v54
  %v56 = vsel %vm50, %v54, %v45
  %v61 = vsel %vm50, %v45, %v51
  %vm62 = vcmask 1046528
  %v63 = vrot.slane %v32, 1
  %v64 = vrot.slane %v33, 1
  %v65 = vsel %vm62, %v63, %v64
  %v66 = vrot.slane %v34, 1
  %v67 = vsel %vm62, %v64, %v66
  %v68 = vrot.slane %v35, 1
  %v69 = vsel %vm62, %v66, %v68
  %v75 = vsel %vm62, %v68, %v63
  %77 = vset.pattern.permute.xlu0 0
  %78 = vperm.xlu0 %77, %v36
  %v79 = vpop.permute.xlu0 %78
  %82 = vset.pattern.permute.xlu0 0
  %83 = vperm.xlu0 %82, %v37
  %v84 = vpop.permute.xlu0 %83
  %87 = vset.pattern.permute.xlu0 0
  %88 = vperm.xlu0 %87, %v38
  %v89 = vpop.permute.xlu0 %88
  %92 = vset.pattern.permute.xlu0 0
  %93 = vperm.xlu0 %92, %v39
  %v94 = vpop.permute.xlu0 %93
  %vm96 = vcmp.gt.f32.partialorder %v79, 0.5
  %vm97 = vcmp.gt.f32.partialorder %v84, 0.5
  %vm98 = vcmp.gt.f32.partialorder %v89, 0.5
  %vm99 = vcmp.gt.f32.partialorder %v94, 0.5
  %v100 = vsel %vm96, %v65, %v61
  %v101 = vsel %vm97, %v67, %v53
  %v102 = vsel %vm98, %v69, %v55
  %v103 = vsel %vm99, %v75, %v56
  %105 = vset.pattern.permute.xlu0 0
  %106 = vperm.xlu0 %105, %v40
  %v107 = vpop.permute.xlu0 %106
  %110 = vset.pattern.permute.xlu0 0
  %111 = vperm.xlu0 %110, %v41
  %v112 = vpop.permute.xlu0 %111
  %115 = vset.pattern.permute.xlu0 0
  %116 = vperm.xlu0 %115, %v42
  %v117 = vpop.permute.xlu0 %116
  %120 = vset.pattern.permute.xlu0 0
  %121 = vperm.xlu0 %120, %v43
  %v122 = vpop.permute.xlu0 %121
  %vm124 = vcmp.gt.f32.partialorder %v107, 0.5
  %vm125 = vcmp.gt.f32.partialorder %v112, 0.5
  %vm126 = vcmp.gt.f32.partialorder %v117, 0.5
  %vm127 = vcmp.gt.f32.partialorder %v122, 0.5
  %v128 = vsel %vm124, %v61, %v65
  %v129 = vsel %vm125, %v53, %v67
  %v130 = vsel %vm126, %v55, %v69
  %v131 = vsel %vm127, %v56, %v75
  %132 = vrot.lane.b32.xlu0 %v32, 4
  %v133 = vpop.permute.xlu0 %132
  %134 = vrot.lane.b32.xlu0 %v33, 4
  %v135 = vpop.permute.xlu0 %134
  %136 = vrot.lane.b32.xlu0 %v34, 4
  %v137 = vpop.permute.xlu0 %136
  %138 = vrot.lane.b32.xlu0 %v35, 4
  %v139 = vpop.permute.xlu0 %138
  %148 = vrot.lane.b32.xlu0 %v128, 8
  %v149 = vpop.permute.xlu0 %148
  %150 = vrot.lane.b32.xlu0 %v129, 8
  %v151 = vpop.permute.xlu0 %150
  %152 = vrot.lane.b32.xlu0 %v130, 8
  %v153 = vpop.permute.xlu0 %152
  %154 = vrot.lane.b32.xlu0 %v131, 8
  %v155 = vpop.permute.xlu0 %154
  %vm160 = vcmask 31744
  %v161 = vsel %vm160, %v100, %v133
  %v162 = vsel %vm160, %v101, %v135
  %v163 = vsel %vm160, %v102, %v137
  %v164 = vsel %vm160, %v103, %v139
  %vm165 = vcmask 64512
  %v166 = vsel %vm165, %v161, %v149
  %v167 = vsel %vm165, %v162, %v151
  %v168 = vsel %vm165, %v163, %v153
  %v169 = vsel %vm165, %v164, %v155
  %v170 = vld [vmem:[%s3] sm:$0xff]
  %v171 = vld [vmem:[%s3 + $0x8] sm:$0xf]
  %v172 = vld [vmem:[%s4] sm:$0x1]
  %v174 = vlaneseq
  %v175 = vshrl.u32 %v174, 7
  %v176 = vsub.s32 0, %v175
  %v177 = vrot.slane %v172, %v176
  %vm179 = vcmask 97280
  %v181 = vsel %vm179, %v166, 0
  %v184 = vsel %vm179, %v167, 0
  %v187 = vsel %vm179, %v168, 0
  %v190 = vsel %vm179, %v169, 0
  %vm192 = vcmask 1043456
  %v194 = vsel %vm192, %v171, 0
  %196 = vmatprep.subr.mxu0 0.0
  %197 = vmatpush1.msra.mxu0 0.0
  %198 = vmatprep.subr.mxu0 0.0
  %199 = vmatpush1.msra.mxu0 0.0
  %200 = vmatprep.subr.mxu0 0.0
  %201 = vmatpush1.msra.mxu0 0.0
  %202 = vmatprep.subr.mxu0 0.0
  %203 = vmatpush1.msra.mxu0 0.0
  %204 = vmatprep.subr.mxu0 0.0
  %205 = vmatpush1.msra.mxu0 0.0
  %206 = vmatprep.subr.mxu0 0.0
  %207 = vmatpush1.msra.mxu0 0.0
  %208 = vmatprep.subr.mxu0 0.0
  %209 = vmatpush1.msra.mxu0 0.0
  %210 = vmatprep.subr.mxu0 0.0
  %211 = vmatpush1.msra.mxu0 0.0
  %212 = vmatprep.subr.mxu0 0.0
  %213 = vmatpush1.msra.mxu0 0.0
  %214 = vmatprep.subr.mxu0 0.0
  %215 = vmatpush1.msra.mxu0 0.0
  %216 = vmatprep.subr.mxu0 0.0
  %217 = vmatpush1.msra.mxu0 0.0
  %218 = vmatprep.subr.mxu0 0.0
  %219 = vmatpush1.msra.mxu0 0.0
  %220 = vmatprep.subr.mxu0 0.0
  %221 = vmatpush1.msra.mxu0 0.0
  %222 = vmatprep.subr.mxu0 0.0
  %223 = vmatpush1.msra.mxu0 0.0
  %224 = vmatprep.subr.mxu0 0.0
  %225 = vmatpush1.msra.mxu0 %v194
  %226 = vmatprep.subr.mxu0 0.0
  %227 = vmatpush1.msra.mxu0 %v170
  %228 = vmatprep.subr.mxu0 0.0
  %229 = vmatpush2.msra.mxu0 0.0
  %230 = vmatprep.subr.mxu0 0.0
  %231 = vmatpush2.msra.mxu0 0.0
  %232 = vmatprep.subr.mxu0 0.0
  %233 = vmatpush2.msra.mxu0 0.0
  %234 = vmatprep.subr.mxu0 0.0
  %235 = vmatpush2.msra.mxu0 0.0
  %236 = vmatprep.subr.mxu0 0.0
  %237 = vmatpush2.msra.mxu0 0.0
  %238 = vmatprep.subr.mxu0 0.0
  %239 = vmatpush2.msra.mxu0 0.0
  %240 = vmatprep.subr.mxu0 0.0
  %241 = vmatpush2.msra.mxu0 0.0
  %242 = vmatprep.subr.mxu0 0.0
  %243 = vmatpush2.msra.mxu0 0.0
  %244 = vmatprep.subr.mxu0 0.0
  %245 = vmatpush2.msra.mxu0 0.0
  %246 = vmatprep.subr.mxu0 0.0
  %247 = vmatpush2.msra.mxu0 0.0
  %248 = vmatprep.subr.mxu0 0.0
  %249 = vmatpush2.msra.mxu0 0.0
  %250 = vmatprep.subr.mxu0 0.0
  %251 = vmatpush2.msra.mxu0 0.0
  %252 = vmatprep.subr.mxu0 0.0
  %253 = vmatpush2.msra.mxu0 0.0
  %254 = vmatprep.subr.mxu0 0.0
  %255 = vmatpush2.msra.mxu0 0.0
  %256 = vmatprep.subr.mxu0 0.0
  %257 = vmatpush2.msra.mxu0 0.0
  %258 = vmatprep.subr.mxu0 0.0
  %259 = vmatpush2.msra.mxu0 0.0
  %260 = vmatprep.mubr.f32.mxu0 0.0
  %261 = vmatmul.mubr.f32.gmra.mxu0 %v181
  %v262 = vpop.f32.mrf.mxu0
  %v263 = vadd.f32 %v177, %v262
  %v264 = vpop.f32.mrf.mxu0
  %265 = vmatprep.mubr.f32.mxu0 0.0
  %266 = vmatmul.mubr.f32.gmra.mxu0 %v184
  %v267 = vpop.f32.mrf.mxu0
  %v268 = vadd.f32 %v177, %v267
  %v269 = vpop.f32.mrf.mxu0
  %270 = vmatprep.mubr.f32.mxu0 0.0
  %271 = vmatmul.mubr.f32.gmra.mxu0 %v187
  %v272 = vpop.f32.mrf.mxu0
  %v273 = vadd.f32 %v177, %v272
  %v274 = vpop.f32.mrf.mxu0
  %275 = vmatprep.mubr.f32.mxu0 0.0
  %276 = vmatmul.mubr.f32.gmra.mxu0 %v190
  %v277 = vpop.f32.mrf.mxu0
  %v278 = vadd.f32 %v177, %v277
  %v279 = vpop.f32.mrf.mxu0
  %280 = vdwg.mxu0
  %v281 = vsel %vm165, %v263, 0.0
  %v282 = vsel %vm165, %v268, 0.0
  %v283 = vadd.f32 %v281, %v282
  %v284 = vsel %vm165, %v273, 0.0
  %v285 = vadd.f32 %v283, %v284
  %v286 = vsel %vm165, %v278, 0.0
  %v287 = vadd.f32 %v285, %v286
  %v288 = vrot.slane %v287, 4
  %v289 = vadd.f32 %v287, %v288
  %v290 = vrot.slane %v289, 2
  %v291 = vadd.f32 %v289, %v290
  %v292 = vrot.slane %v291, 1
  %v293 = vadd.f32 %v291, %v292
  %v294 = vrcp.pop 32.0
  %v295 = vmul.f32 %v293, %v294
  %v296 = vsub.f32 %v263, %v295
  %v297 = vsub.f32 %v268, %v295
  %v298 = vsub.f32 %v273, %v295
  %v299 = vsub.f32 %v278, %v295
  %v300 = vmul.f32 %v296, %v296
  %v301 = vmul.f32 %v297, %v297
  %v302 = vmul.f32 %v298, %v298
  %v303 = vmul.f32 %v299, %v299
  %v304 = vsel %vm165, %v300, 0.0
  %v305 = vsel %vm165, %v301, 0.0
  %v306 = vadd.f32 %v304, %v305
  %v307 = vsel %vm165, %v302, 0.0
  %v308 = vadd.f32 %v306, %v307
  %v309 = vsel %vm165, %v303, 0.0
  %v310 = vadd.f32 %v308, %v309
  %v311 = vrot.slane %v310, 4
  %v312 = vadd.f32 %v310, %v311
  %v313 = vrot.slane %v312, 2
  %v314 = vadd.f32 %v312, %v313
  %v315 = vrot.slane %v314, 1
  %v316 = vadd.f32 %v314, %v315
  %v317 = vmul.f32 %v316, %v294
  %v318 = vld [vmem:[%s5] sm:$0x1]
  %v319 = vadd.f32 %v317, 1e-05
  %v320 = vrsqrt.pop %v319
  %v321 = vmul.f32 %v318, %v320
  %v322 = vld [vmem:[%s6] sm:$0x1]
  %v323 = vmul.f32 %v295, %v321
  %v324 = vsub.f32 %v322, %v323
  %v326 = vlaneseq
  %v327 = vshrl.u32 %v326, 7
  %v328 = vsub.s32 0, %v327
  %v329 = vrot.slane %v321, %v328
  %v331 = vmul.f32 %v263, %v329
  %v332 = vmul.f32 %v268, %v329
  %v333 = vmul.f32 %v273, %v329
  %v334 = vmul.f32 %v278, %v329
  %v336 = vlaneseq
  %v337 = vshrl.u32 %v336, 7
  %v338 = vsub.s32 0, %v337
  %v339 = vrot.slane %v324, %v338
  %v341 = vadd.f32 %v331, %v339
  %v342 = vadd.f32 %v332, %v339
  %v343 = vadd.f32 %v333, %v339
  %v344 = vadd.f32 %v334, %v339
  %vm345 = vcmp.gt.f32.partialorder %v341, 0.0
  %vm346 = vcmp.gt.f32.partialorder %v342, 0.0
  %vm347 = vcmp.gt.f32.partialorder %v343, 0.0
  %vm348 = vcmp.gt.f32.partialorder %v344, 0.0
  %v349 = vmul.f32 %v341, 0.01
  %v350 = vmul.f32 %v342, 0.01
  %v351 = vmul.f32 %v343, 0.01
  %v352 = vmul.f32 %v344, 0.01
  %v353 = vsel %vm345, %v341, %v349
  %v354 = vsel %vm346, %v342, %v350
  %v355 = vsel %vm347, %v343, %v351
  %v356 = vsel %vm348, %v344, %v352
  %v358 = vrot.slane %v356, 7
  %v363 = vrot.slane %v353, 7
  %v364 = vrot.slane %v354, 7
  %v365 = vsel %vm50, %v363, %v364
  %v366 = vrot.slane %v355, 7
  %v367 = vsel %vm50, %v364, %v366
  %v368 = vsel %vm50, %v366, %v358
  %v373 = vsel %vm50, %v358, %v363
  %v374 = vrot.slane %v353, 1
  %v375 = vrot.slane %v354, 1
  %v376 = vsel %vm62, %v374, %v375
  %v377 = vrot.slane %v355, 1
  %v378 = vsel %vm62, %v375, %v377
  %v379 = vrot.slane %v356, 1
  %v380 = vsel %vm62, %v377, %v379
  %v386 = vsel %vm62, %v379, %v374
  %v387 = vsel %vm96, %v376, %v373
  %v388 = vsel %vm97, %v378, %v365
  %v389 = vsel %vm98, %v380, %v367
  %v390 = vsel %vm99, %v386, %v368
  %v391 = vsel %vm124, %v373, %v376
  %v392 = vsel %vm125, %v365, %v378
  %v393 = vsel %vm126, %v367, %v380
  %v394 = vsel %vm127, %v368, %v386
  %395 = vrot.lane.b32.xlu0 %v353, 8
  %v396 = vpop.permute.xlu0 %395
  %397 = vrot.lane.b32.xlu0 %v354, 8
  %v398 = vpop.permute.xlu0 %397
  %399 = vrot.lane.b32.xlu0 %v355, 8
  %v400 = vpop.permute.xlu0 %399
  %401 = vrot.lane.b32.xlu0 %v356, 8
  %v402 = vpop.permute.xlu0 %401
  %411 = vrot.lane.b32.xlu0 %v391, 16
  %v412 = vpop.permute.xlu0 %411
  %413 = vrot.lane.b32.xlu0 %v392, 16
  %v414 = vpop.permute.xlu0 %413
  %415 = vrot.lane.b32.xlu0 %v393, 16
  %v416 = vpop.permute.xlu0 %415
  %417 = vrot.lane.b32.xlu0 %v394, 16
  %v418 = vpop.permute.xlu0 %417
  %v423 = vsel %vm165, %v387, %v396
  %v424 = vsel %vm165, %v388, %v398
  %v425 = vsel %vm165, %v389, %v400
  %v426 = vsel %vm165, %v390, %v402
  %vm427 = vcmask 130048
  %v428 = vsel %vm427, %v423, %v412
  %v429 = vsel %vm427, %v424, %v414
  %v430 = vsel %vm427, %v425, %v416
  %v431 = vsel %vm427, %v426, %v418
  %v432 = vld [vmem:[%s7] sm:$0xff]
  %v433 = vld [vmem:[%s7 + $0x8] sm:$0xff]
  %v434 = vld [vmem:[%s7 + $0x10] sm:$0xff]
  %v435 = vld [vmem:[%s8] sm:$0x1]
  %v437 = vlaneseq
  %v438 = vshrl.u32 %v437, 7
  %v439 = vsub.s32 0, %v438
  %v440 = vrot.slane %v435, %v439
  %vm442 = vcmask 195584
  %v444 = vsel %vm442, %v428, 0
  %v447 = vsel %vm442, %v429, 0
  %v450 = vsel %vm442, %v430, 0
  %v453 = vsel %vm442, %v431, 0
  %455 = vmatprep.subr.mxu0 0.0
  %456 = vmatpush1.msra.mxu0 0.0
  %457 = vmatprep.subr.mxu0 0.0
  %458 = vmatpush1.msra.mxu0 0.0
  %459 = vmatprep.subr.mxu0 0.0
  %460 = vmatpush1.msra.mxu0 0.0
  %461 = vmatprep.subr.mxu0 0.0
  %462 = vmatpush1.msra.mxu0 0.0
  %463 = vmatprep.subr.mxu0 0.0
  %464 = vmatpush1.msra.mxu0 0.0
  %465 = vmatprep.subr.mxu0 0.0
  %466 = vmatpush1.msra.mxu0 0.0
  %467 = vmatprep.subr.mxu0 0.0
  %468 = vmatpush1.msra.mxu0 0.0
  %469 = vmatprep.subr.mxu0 0.0
  %470 = vmatpush1.msra.mxu0 0.0
  %471 = vmatprep.subr.mxu0 0.0
  %472 = vmatpush1.msra.mxu0 0.0
  %473 = vmatprep.subr.mxu0 0.0
  %474 = vmatpush1.msra.mxu0 0.0
  %475 = vmatprep.subr.mxu0 0.0
  %476 = vmatpush1.msra.mxu0 0.0
  %477 = vmatprep.subr.mxu0 0.0
  %478 = vmatpush1.msra.mxu0 0.0
  %479 = vmatprep.subr.mxu0 0.0
  %480 = vmatpush1.msra.mxu0 0.0
  %481 = vmatprep.subr.mxu0 0.0
  %482 = vmatpush1.msra.mxu0 %v434
  %483 = vmatprep.subr.mxu0 0.0
  %484 = vmatpush1.msra.mxu0 %v433
  %485 = vmatprep.subr.mxu0 0.0
  %486 = vmatpush1.msra.mxu0 %v432
  %487 = vmatprep.subr.mxu0 0.0
  %488 = vmatpush2.msra.mxu0 0.0
  %489 = vmatprep.subr.mxu0 0.0
  %490 = vmatpush2.msra.mxu0 0.0
  %491 = vmatprep.subr.mxu0 0.0
  %492 = vmatpush2.msra.mxu0 0.0
  %493 = vmatprep.subr.mxu0 0.0
  %494 = vmatpush2.msra.mxu0 0.0
  %495 = vmatprep.subr.mxu0 0.0
  %496 = vmatpush2.msra.mxu0 0.0
  %497 = vmatprep.subr.mxu0 0.0
  %498 = vmatpush2.msra.mxu0 0.0
  %499 = vmatprep.subr.mxu0 0.0
  %500 = vmatpush2.msra.mxu0 0.0
  %501 = vmatprep.subr.mxu0 0.0
  %502 = vmatpush2.msra.mxu0 0.0
  %503 = vmatprep.subr.mxu0 0.0
  %504 = vmatpush2.msra.mxu0 0.0
  %505 = vmatprep.subr.mxu0 0.0
  %506 = vmatpush2.msra.mxu0 0.0
  %507 = vmatprep.subr.mxu0 0.0
  %508 = vmatpush2.msra.mxu0 0.0
  %509 = vmatprep.subr.mxu0 0.0
  %510 = vmatpush2.msra.mxu0 0.0
  %511 = vmatprep.subr.mxu0 0.0
  %512 = vmatpush2.msra.mxu0 0.0
  %513 = vmatprep.subr.mxu0 0.0
  %514 = vmatpush2.msra.mxu0 0.0
  %515 = vmatprep.subr.mxu0 0.0
  %516 = vmatpush2.msra.mxu0 0.0
  %517 = vmatprep.subr.mxu0 0.0
  %518 = vmatpush2.msra.mxu0 0.0
  %519 = vmatprep.mubr.f32.mxu0 0.0
  %520 = vmatmul.mubr.f32.gmra.mxu0 %v444
  %v521 = vpop.f32.mrf.mxu0
  %v522 = vadd.f32 %v440, %v521
  %v523 = vpop.f32.mrf.mxu0
  %524 = vmatprep.mubr.f32.mxu0 0.0
  %525 = vmatmul.mubr.f32.gmra.mxu0 %v447
  %v526 = vpop.f32.mrf.mxu0
  %v527 = vadd.f32 %v440, %v526
  %v528 = vpop.f32.mrf.mxu0
  %529 = vmatprep.mubr.f32.mxu0 0.0
  %530 = vmatmul.mubr.f32.gmra.mxu0 %v450
  %v531 = vpop.f32.mrf.mxu0
  %v532 = vadd.f32 %v440, %v531
  %v533 = vpop.f32.mrf.mxu0
  %534 = vmatprep.mubr.f32.mxu0 0.0
  %535 = vmatmul.mubr.f32.gmra.mxu0 %v453
  %v536 = vpop.f32.mrf.mxu0
  %v537 = vadd.f32 %v440, %v536
  %v538 = vpop.f32.mrf.mxu0
  %539 = vdwg.mxu0
  %v540 = vadd.f32 %v522, %v32
  %v541 = vadd.f32 %v527, %v33
  %v542 = vadd.f32 %v532, %v34
  %v543 = vadd.f32 %v537, %v35
  %544 = vst.msk [vmem:[%s9] sm:$0xff] %vm160, %v540
  %545 = vst.msk [vmem:[%s9 + $0x8] sm:$0xff] %vm160, %v541
  %546 = vst.msk [vmem:[%s9 + $0x10] sm:$0xff] %vm160, %v542
  %547 = vst.msk [vmem:[%s9 + $0x18] sm:$0xff] %vm160, %v543
  // Predicated region
  $region38: #{tpu_custom_call.1} parent=0 // pred_check
    _
  $region39: #{tpu_custom_call.1} parent=0 // pred_check_branch
    %549 = sbr.rel (0) target = $region41
  $region40: #{tpu_custom_call.1} parent=0 // pred_region
    _
  $region41: #{tpu_custom_call.1} parent=0 // pred_fallthru
    _
  // Predicated region
  $region42: #{tpu_custom_call.1} parent=0 // pred_check
    _
  $region43: #{tpu_custom_call.1} parent=0 // pred_check_branch
    %551 = sbr.rel (0) target = $region45
  $region44: #{tpu_custom_call.1} parent=0 // pred_region
    _
  $region45: #{tpu_custom_call.1} parent=0 // pred_fallthru
    _

</llo_original>
